<compile_context>
chip_gen: v6e
topology: v6e:2x2x1
jax: 0.10.0
libtpu: 0.0.40
codegen_flags: <defaults>
</compile_context>

<pallas_src>
import functools
import math

import jax
import jax.numpy as jnp
import numpy as np
from jax import lax
from jax.experimental import pallas as pl
from jax.experimental.pallas import tpu as pltpu

LANES = 128


def _focal_tile(x, t, gamma):
    """Per-pixel focal loss for one tile.

    x: (C, bs) logits (native dtype), class axis on sublanes, pixels on lanes.
    t: (1, bs) integer class ids.
    Returns (1, bs) float32 focal loss.
    """
    xf = x.astype(jnp.float32)

    # Numerically-stable log-softmax cross entropy over the class (sublane) axis.
    m = jnp.max(xf, axis=0, keepdims=True)                        # (1, bs)
    se = jnp.sum(jnp.exp(xf - m), axis=0, keepdims=True)          # (1, bs)
    cls = lax.broadcasted_iota(jnp.int32, xf.shape, 0)            # (C, bs)
    hit = cls == t.astype(jnp.int32)
    x_t = jnp.sum(jnp.where(hit, xf, 0.0), axis=0, keepdims=True)
    ce = (jnp.log(se) + m) - x_t                                  # (1, bs)

    pt = jnp.exp(-ce)
    w = 1.0 - pt
    g = float(gamma)
    # Small integer gammas stay on the VPU; jnp.power lowers to exp(g*log(x)),
    # i.e. 2 extra EUP transcendentals per element.
    if g == 0.0:
        fw = jnp.ones_like(w)
    elif g == 1.0:
        fw = w
    elif g.is_integer() and 2.0 <= g <= 8.0:
        fw = w
        for _ in range(int(g) - 1):
            fw = fw * w
    else:
        fw = jnp.power(w, g)
    return fw * ce


def _focal_sum_kernel(x_ref, t_ref, acc_ref, *, gamma, S, block_s):
    s = pl.program_id(1)

    @pl.when(s == 0)
    def _():
        acc_ref[...] = jnp.zeros_like(acc_ref)

    loss = _focal_tile(x_ref[...], t_ref[...], gamma)   # (1, block_s) f32

    tail = S % block_s
    if tail:  # trace-time: masking code only exists if the last block is partial
        is_last = s == pl.num_programs(1) - 1

        @pl.when(is_last)
        def _():
            lane = lax.broadcasted_iota(jnp.int32, (1, block_s), 1)
            acc_ref[...] += jnp.where(lane < tail, loss, 0.0)

        @pl.when(jnp.logical_not(is_last))
        def _():
            acc_ref[...] += loss
    else:
        acc_ref[...] += loss


def _focal_map_kernel(x_ref, t_ref, out_ref, *, gamma):
    # Garbage lanes of a partial edge block are discarded by the clipped
    # output write-back, so no masking is needed here.
    out_ref[...] = _focal_tile(x_ref[...], t_ref[...], gamma).astype(out_ref.dtype)


def cross_focal_loss(inputs, targets, *, gamma=2.0, reduction="mean", block_s=None):
    """inputs: (N, C, *spatial) logits; targets: (N, *spatial) integer class ids."""
    if inputs.ndim < 2:
        raise ValueError("inputs must be (N, C, ...) logits")
    N, C = int(inputs.shape[0]), int(inputs.shape[1])
    S = int(math.prod(inputs.shape[2:]))

    itemsize = jnp.dtype(inputs.dtype).itemsize

    # Native layout: reshape only (free) -- no transpose, no padding HBM pass.
    x = inputs.reshape(N, C, S)
    t = targets
    if not (jnp.issubdtype(t.dtype, jnp.integer)
            and jnp.dtype(t.dtype).itemsize in (1, 4)):
        t = t.astype(jnp.int32)
    t = t.reshape(N, 1, S)
    t_item = jnp.dtype(t.dtype).itemsize

    # Tile sizing: ~2 MiB of (logits + targets) per grid step keeps the
    # ~0.35us fixed per-step overhead <10% and the DMA near the HBM roofline;
    # the extra caps keep the f32 working set inside scoped VMEM on v5e/v6e/v7x.
    per_pixel = C * itemsize + t_item
    if block_s is None:
        block_s = (2 << 20) // max(1, per_pixel)
        block_s = min(block_s, 128 * 1024)
        block_s = max(block_s, 512)
        block_s = min(block_s, max(128, (4 << 20) // max(1, 4 * C)))
    block_s = max(LANES, (int(block_s) // LANES) * LANES)
    if block_s >= S:
        block_s = S            # one block covering the whole pixel axis
    grid_s = -(-S // block_s)  # cdiv

    x_tile = C * block_s * itemsize
    t_tile = block_s * t_item
    vmem_est = 2 * (x_tile + t_tile + block_s * 4) + 8 * C * block_s * 4 + (2 << 20)
    vmem_limit = int(min(48 << 20, max(32 << 20, vmem_est)))

    n_pix = N * S
    out_bytes = N * block_s * 4 if reduction in ("mean", "sum") else n_pix * itemsize
    cost = pl.CostEstimate(
        flops=int(n_pix * (5 * C + 12)),
        transcendentals=int(n_pix * (C + 2)),
        bytes_accessed=int(n_pix * C * itemsize + n_pix * t_item + out_bytes),
    )

    x_spec = pl.BlockSpec((None, C, block_s), lambda n, s: (n, 0, s))
    t_spec = pl.BlockSpec((None, 1, block_s), lambda n, s: (n, 0, s))

    if reduction in ("mean", "sum"):
        kernel = functools.partial(_focal_sum_kernel, gamma=float(gamma),
                                   S=S, block_s=block_s)
        partial = pl.pallas_call(
            kernel,
            out_shape=jax.ShapeDtypeStruct((N, 1, block_s), jnp.float32),
            grid_spec=pltpu.PrefetchScalarGridSpec(
                num_scalar_prefetch=0,
                grid=(N, grid_s),
                in_specs=[x_spec, t_spec],
                out_specs=pl.BlockSpec((None, 1, block_s), lambda n, s: (n, 0, 0)),
            ),
            compiler_params=pltpu.CompilerParams(
                dimension_semantics=("parallel", "arbitrary"),
                vmem_limit_bytes=vmem_limit),
            cost_estimate=cost,
        )(x, t)
        total = jnp.sum(partial)
        if reduction == "mean":
            return (total / n_pix).astype(inputs.dtype)
        return total.astype(inputs.dtype)

    elif reduction == "none":
        kernel = functools.partial(_focal_map_kernel, gamma=float(gamma))
        out = pl.pallas_call(
            kernel,
            out_shape=jax.ShapeDtypeStruct((N, 1, S), inputs.dtype),
            grid_spec=pltpu.PrefetchScalarGridSpec(
                num_scalar_prefetch=0,
                grid=(N, grid_s),
                in_specs=[x_spec, t_spec],
                out_specs=pl.BlockSpec((None, 1, block_s), lambda n, s: (n, 0, s)),
            ),
            compiler_params=pltpu.CompilerParams(
                dimension_semantics=("parallel", "parallel"),
                vmem_limit_bytes=vmem_limit),
            cost_estimate=cost,
        )(x, t)
        return out.reshape(targets.shape)

    else:
        raise ValueError(f"unknown reduction: {reduction!r}")


class CrossFocalLoss:
    """Thin parity wrapper mirroring the PyTorch module."""

    def __init__(self, gamma: float = 2.0, reduction: str = "mean"):
        self.gamma = gamma
        self.reduction = reduction

    def __call__(self, inputs, targets):
        return cross_focal_loss(inputs, targets, gamma=self.gamma,
                                reduction=self.reduction)


def _reference_map(inputs, targets, gamma=2.0):
    x = inputs.astype(jnp.float32)
    logp = jax.nn.log_softmax(x, axis=1)
    tt = jnp.expand_dims(targets.astype(jnp.int32), 1)
    ce = -jnp.take_along_axis(logp, tt, axis=1)[:, 0]
    pt = jnp.exp(-ce)
    return (1.0 - pt) ** gamma * ce


if __name__ == "__main__":
    key = jax.random.PRNGKey(0)
    k1, k2, k3, k4 = jax.random.split(key, 4)

    # Case 1: NCHW logits, lane-friendly spatial size (S = 256).
    B, C, H, W = 2, 4, 16, 16
    x1 = jax.random.normal(k1, (B, C, H, W), dtype=jnp.float32) * 2.0
    t1 = jax.random.randint(k2, (B, H, W), 0, C, dtype=jnp.int32)
    ref1 = _reference_map(x1, t1, 2.0)

    loss_fn = CrossFocalLoss(gamma=2.0, reduction="mean")
    out_mean = jax.block_until_ready(loss_fn(x1, t1))
    np.testing.assert_allclose(np.asarray(out_mean), np.asarray(jnp.mean(ref1)),
                               rtol=1e-5, atol=1e-6)

    out_none = jax.block_until_ready(
        cross_focal_loss(x1, t1, gamma=2.0, reduction="none"))
    np.testing.assert_allclose(np.asarray(out_none), np.asarray(ref1),
                               rtol=1e-5, atol=1e-6)

    # Case 2: non-128-divisible spatial size (S = 225) with a forced small
    # block to exercise the partial edge-block DMA + gated tail masking.
    B2, C2, H2, W2 = 2, 3, 15, 15
    x2 = jax.random.normal(k3, (B2, C2, H2, W2), dtype=jnp.float32) * 2.0
    t2 = jax.random.randint(k4, (B2, H2, W2), 0, C2, dtype=jnp.int32)
    ref2 = _reference_map(x2, t2, 2.0)

    out2_sum = jax.block_until_ready(
        cross_focal_loss(x2, t2, gamma=2.0, reduction="sum", block_s=128))
    np.testing.assert_allclose(np.asarray(out2_sum), np.asarray(jnp.sum(ref2)),
                               rtol=1e-5, atol=1e-5)

    out2_none = jax.block_until_ready(
        cross_focal_loss(x2, t2, gamma=2.0, reduction="none", block_s=128))
    np.testing.assert_allclose(np.asarray(out2_none), np.asarray(ref2),
                               rtol=1e-5, atol=1e-6)

    print("KERNEL_OK")
</pallas_src>

<mosaic_0001>
module attributes {stable_mosaic.version = 11 : i64} {
  func.func @_focal_sum_kernel(%arg0: i32, %arg1: i32, %arg2: memref<1x4x256xf32, #tpu.memory_space<vmem>>, %arg3: memref<1x1x256xi32, #tpu.memory_space<vmem>>, %arg4: memref<1x1x256xf32, #tpu.memory_space<vmem>>) attributes {dimension_semantics = [#tpu.dimension_semantics<parallel>, #tpu.dimension_semantics<arbitrary>], iteration_bounds = array<i64: 2, 1>, scalar_prefetch = 0 : i64, scratch_operands = 0 : i64, tpu.core_type = #tpu.core_type<tc>, window_params = [{transform_indices = @transform_0, window_bounds = array<i64: 1, 4, 256>}, {transform_indices = @transform_1, window_bounds = array<i64: 1, 1, 256>}, {transform_indices = @transform_2, window_bounds = array<i64: 1, 1, 256>}]} {
    %c0_i32 = arith.constant 0 : i32
    %0 = arith.cmpi eq, %arg1, %c0_i32 : i32
    %1 = arith.extui %0 : i1 to i32
    %c0_i32_0 = arith.constant 0 : i32
    %2 = arith.cmpi ne, %1, %c0_i32_0 : i32
    scf.if %2 {
      %cst_17 = arith.constant 0.000000e+00 : f32
      %37 = vector.broadcast %cst_17 : f32 to vector<1x256xf32>
      %c0_18 = arith.constant 0 : index
      %c0_19 = arith.constant 0 : index
      %c0_20 = arith.constant 0 : index
      %38 = vector.load %arg4[%c0_18, %c0_19, %c0_20] : memref<1x1x256xf32, #tpu.memory_space<vmem>>, vector<1x1x256xf32>
      %39 = vector.shape_cast %38 : vector<1x1x256xf32> to vector<1x256xf32>
      %40 = vector.shape_cast %37 : vector<1x256xf32> to vector<1x1x256xf32>
      tpu.vector_store %arg4[%c0_18, %c0_19, %c0_20], %40 {strides = array<i32>} : memref<1x1x256xf32, #tpu.memory_space<vmem>>, vector<1x1x256xf32>,
    } else {
    }
    %c0 = arith.constant 0 : index
    %c0_1 = arith.constant 0 : index
    %c0_2 = arith.constant 0 : index
    %3 = vector.load %arg2[%c0, %c0_1, %c0_2] : memref<1x4x256xf32, #tpu.memory_space<vmem>>, vector<1x4x256xf32>
    %4 = vector.shape_cast %3 : vector<1x4x256xf32> to vector<4x256xf32>
    %c0_3 = arith.constant 0 : index
    %c0_4 = arith.constant 0 : index
    %c0_5 = arith.constant 0 : index
    %5 = vector.load %arg3[%c0_3, %c0_4, %c0_5] : memref<1x1x256xi32, #tpu.memory_space<vmem>>, vector<1x1x256xi32>
    %6 = vector.shape_cast %5 : vector<1x1x256xi32> to vector<1x256xi32>
    %cst = arith.constant dense<0xFF800000> : vector<256xf32>
    %7 = vector.multi_reduction <maximumf>, %4, %cst [0] : vector<4x256xf32> to vector<256xf32>
    %8 = vector.shape_cast %7 : vector<256xf32> to vector<1x256xf32>
    %9 = vector.broadcast %8 : vector<1x256xf32> to vector<4x256xf32>
    %10 = arith.subf %4, %9 : vector<4x256xf32>
    %11 = math.exp %10 : vector<4x256xf32>
    %cst_6 = arith.constant dense<0.000000e+00> : vector<256xf32>
    %12 = vector.multi_reduction <add>, %11, %cst_6 [0] : vector<4x256xf32> to vector<256xf32>
    %13 = vector.shape_cast %12 : vector<256xf32> to vector<1x256xf32>
    %14 = tpu.iota {dimensions = array<i32: 0>} : vector<4x256xi32>
    %15 = vector.broadcast %6 : vector<1x256xi32> to vector<4x256xi32>
    %16 = arith.cmpi eq, %14, %15 : vector<4x256xi32>
    %cst_7 = arith.constant 0.000000e+00 : f32
    %17 = vector.broadcast %cst_7 : f32 to vector<4x256xf32>
    %18 = arith.select %16, %4, %17 : vector<4x256xi1>, vector<4x256xf32>
    %cst_8 = arith.constant dense<0.000000e+00> : vector<256xf32>
    %19 = vector.multi_reduction <add>, %18, %cst_8 [0] : vector<4x256xf32> to vector<256xf32>
    %20 = vector.shape_cast %19 : vector<256xf32> to vector<1x256xf32>
    %21 = math.log %13 : vector<1x256xf32>
    %22 = arith.addf %21, %8 : vector<1x256xf32>
    %23 = arith.subf %22, %20 : vector<1x256xf32>
    %cst_9 = arith.constant 0.000000e+00 : f32
    %24 = vector.broadcast %cst_9 : f32 to vector<1x256xf32>
    %25 = arith.subf %24, %23 : vector<1x256xf32>
    %26 = math.exp %25 : vector<1x256xf32>
    %cst_10 = arith.constant 1.000000e+00 : f32
    %27 = vector.broadcast %cst_10 : f32 to vector<1x256xf32>
    %28 = arith.subf %27, %26 : vector<1x256xf32>
    %29 = arith.mulf %28, %28 : vector<1x256xf32>
    %30 = arith.mulf %29, %23 : vector<1x256xf32>
    %c0_11 = arith.constant 0 : index
    %c0_12 = arith.constant 0 : index
    %c0_13 = arith.constant 0 : index
    %31 = vector.load %arg4[%c0_11, %c0_12, %c0_13] : memref<1x1x256xf32, #tpu.memory_space<vmem>>, vector<1x1x256xf32>
    %32 = vector.shape_cast %31 : vector<1x1x256xf32> to vector<1x256xf32>
    %33 = arith.addf %32, %30 : vector<1x256xf32>
    %c0_14 = arith.constant 0 : index
    %c0_15 = arith.constant 0 : index
    %c0_16 = arith.constant 0 : index
    %34 = vector.load %arg4[%c0_14, %c0_15, %c0_16] : memref<1x1x256xf32, #tpu.memory_space<vmem>>, vector<1x1x256xf32>
    %35 = vector.shape_cast %34 : vector<1x1x256xf32> to vector<1x256xf32>
    %36 = vector.shape_cast %33 : vector<1x256xf32> to vector<1x1x256xf32>
    tpu.vector_store %arg4[%c0_14, %c0_15, %c0_16], %36 {strides = array<i32>} : memref<1x1x256xf32, #tpu.memory_space<vmem>>, vector<1x1x256xf32>,
    return
  }
  func.func @transform_0(%arg0: i32, %arg1: i32) -> (i32, i32, i32) {
    %c0_i32 = arith.constant 0 : i32
    %c0_i32_0 = arith.constant 0 : i32
    return %arg0, %c0_i32, %arg1 : i32, i32, i32
  }
  func.func @transform_1(%arg0: i32, %arg1: i32) -> (i32, i32, i32) {
    %c0_i32 = arith.constant 0 : i32
    %c0_i32_0 = arith.constant 0 : i32
    return %arg0, %c0_i32, %arg1 : i32, i32, i32
  }
  func.func @transform_2(%arg0: i32, %arg1: i32) -> (i32, i32, i32) {
    %c0_i32 = arith.constant 0 : i32
    %c0_i32_0 = arith.constant 0 : i32
    %c0_i32_1 = arith.constant 0 : i32
    return %arg0, %c0_i32, %c0_i32_0 : i32, i32, i32
  }
}

</mosaic_0001>

<llo_original>
// kernel: tpu_custom_call.1
$region0: #{tpu_custom_call.1}
  #allocation0 [shape = 'u32[]', space=smem, size = 0x4, offset = 0x4, fixed_abs, tag = 'smem constant byte address 0x4 - core index']
  #allocation1 [shape = 'u32[144,128]{1,0:T(1,128)}', space=vmem, size = 0x12000, scoped, tag = 'internal scratch']
  %s0 = inlined_call_operand.hbm [shape: f32[2,4,256], index: 0, kind: input, shape index: {}]
  %s1 = inlined_call_operand.hbm [shape: s32[2,1,256], index: 1, kind: input, shape index: {}]
  %s2 = inlined_call_operand.hbm [shape: f32[2,1,256], index: 2, kind: output, shape index: {}]
  %s3 = sld [smem:[#allocation0]]
  $region53: #{tpu_custom_call.1} parent=0
    _
  %s5 = ssub.s32 1, %s3
  %s6 = scalar_select 0, %s5, %s3
  $region1: #{tpu_custom_call.1} parent=0
    #allocation2 [shape = 'u8[8192]{0}', space=vmem, size = 0x2000, scoped, tag = 'input window, operand 0']
    #allocation3 [shape = 's32[2]{0}', space=sflag, size = 0x8, scoped, tag = 'scoped memory for tpu_custom_call.1']
    #allocation4 [shape = 's32[2]{0}', space=sflag, size = 0x8, scoped, tag = 'scoped memory for tpu_custom_call.1']
    #allocation5 [shape = 'u8[2048]{0}', space=vmem, size = 0x800, scoped, tag = 'input window, operand 1']
    #allocation6 [shape = 's32[2]{0}', space=sflag, size = 0x8, scoped, tag = 'scoped memory for tpu_custom_call.1']
    #allocation7 [shape = 'u8[2048]{0}', space=vmem, size = 0x800, scoped, tag = 'output window, operand 0']
    %7 = vsyncpa [#allocation3], 0
    %s8 = scalar_lea.sflag [#allocation3], 1
    %9 = vsyncpa %s8, 0
    %10 = vsyncpa [#allocation6], 0
    %s11 = scalar_lea.sflag [#allocation6], 1
    %12 = vsyncpa %s11, 0
    %13 = vsyncpa [#allocation4], 0
    %s14 = scalar_lea.sflag [#allocation4], 1
    %15 = vsyncpa %s14, 0
    loop: start=0, step=1, limit=4
    $region2: #{tpu_custom_call.1} parent=1 // loop_pre_header
      _
    $region3: #{tpu_custom_call.1} parent=1 // loop_header
      %s17 = sphi 0, %s21
      %p18 = scmp.ge.s32.totalorder %s17, 4
      %s24 = sphi 0, %s36
      %s25 = sphi 0, %s32
      %s26 = sphi 0, %s24
      %s27 = sphi 0, %s25
      %s28 = sphi 0, %s26
      %s29 = sphi 0, %s27
      %s41 = sphi 0, %s43
      %s44 = sphi 0, %s41
      %s45 = sphi 0, %s44
      %s61 = sphi 0, %s45
      %s69 = sphi 0, %s71
      %s72 = sphi 0, %s69
      %s73 = sphi 0, %s72
      %s89 = sphi 0, %s73
      %s95 = sphi 0, %s97
      %s98 = sphi 0, %s95
      %s99 = sphi 0, %s98
      %s115 = sphi 0, %s99
    $region4: #{tpu_custom_call.1} parent=1 // loop_header_branch
      %20 = sbr.rel (%p18) target = $region8
    $region5: #{tpu_custom_call.1} parent=1 // loop_body
      %s22 = ssub.s32 %s17, 1
      %s23 = ssub.s32 %s17, 2
      %s30 = sadd.s32 1, %s25
      %p31 = scmp.ge.s32.totalorder %s30, 1
      %s32 = scalar_select %p31, 0, %s30
      %s33 = sadd.s32 1, %s24
      %s34 = scalar_select %p31, %s33, %s24
      %p35 = scmp.ge.s32.totalorder %s34, 2
      %s36 = scalar_select %p35, 0, %s34
      %s37 = ssub.s32 %s24, %s36
      %s38 = ssub.s32 %s25, %s32
      %s39 = sor.u32 %s37, %s38
      %p40 = scmp.eq.s32.totalorder %s39, 0
      %s42 = sadd.s32 %s41, 1
      %s43 = scalar_select %p40, %s41, %s42
      %p46 = pneg %p40
      %p47 = scmp.eq.s32.totalorder %s17, 1
      %p48 = por %p46, %p47
      %p49 = scmp.ne.s32.totalorder %s41, %s44
      %p50 = scmp.eq.s32.totalorder %s17, 0
      %p51 = por %p49, %p50
      %p52 = scmp.ne.s32.totalorder %s41, %s44
      %p53 = scmp.eq.s32.totalorder %s22, 1
      %p54 = por %p52, %p53
      %p55 = scmp.ne.s32.totalorder %s44, %s45
      %p56 = scmp.eq.s32.totalorder %s22, 0
      %p57 = por %p55, %p56
      %p58 = scmp.ne.s32.totalorder %s44, %s45
      %p59 = scmp.eq.s32.totalorder %s23, 1
      %p60 = por %p58, %p59
      %p62 = scmp.ne.s32.totalorder %s45, %s61
      %p63 = scmp.eq.s32.totalorder %s23, 0
      %p64 = por %p62, %p63
      %s65 = ssub.s32 %s24, %s36
      %s66 = ssub.s32 %s25, %s32
      %s67 = sor.u32 %s65, %s66
      %p68 = scmp.eq.s32.totalorder %s67, 0
      %s70 = sadd.s32 %s69, 1
      %s71 = scalar_select %p68, %s69, %s70
      %p74 = pneg %p68
      %p75 = scmp.eq.s32.totalorder %s17, 1
      %p76 = por %p74, %p75
      %p77 = scmp.ne.s32.totalorder %s69, %s72
      %p78 = scmp.eq.s32.totalorder %s17, 0
      %p79 = por %p77, %p78
      %p80 = scmp.ne.s32.totalorder %s69, %s72
      %p81 = scmp.eq.s32.totalorder %s22, 1
      %p82 = por %p80, %p81
      %p83 = scmp.ne.s32.totalorder %s72, %s73
      %p84 = scmp.eq.s32.totalorder %s22, 0
      %p85 = por %p83, %p84
      %p86 = scmp.ne.s32.totalorder %s72, %s73
      %p87 = scmp.eq.s32.totalorder %s23, 1
      %p88 = por %p86, %p87
      %p90 = scmp.ne.s32.totalorder %s73, %s89
      %p91 = scmp.eq.s32.totalorder %s23, 0
      %p92 = por %p90, %p91
      %s93 = ssub.s32 %s24, %s36
      %p94 = scmp.eq.s32.totalorder %s93, 0
      %s96 = sadd.s32 %s95, 1
      %s97 = scalar_select %p94, %s95, %s96
      %p100 = pneg %p94
      %p101 = scmp.eq.s32.totalorder %s17, 1
      %p102 = por %p100, %p101
      %p103 = scmp.ne.s32.totalorder %s95, %s98
      %p104 = scmp.eq.s32.totalorder %s17, 0
      %p105 = por %p103, %p104
      %p106 = scmp.ne.s32.totalorder %s95, %s98
      %p107 = scmp.eq.s32.totalorder %s22, 1
      %p108 = por %p106, %p107
      %p109 = scmp.ne.s32.totalorder %s98, %s99
      %p110 = scmp.eq.s32.totalorder %s22, 0
      %p111 = por %p109, %p110
      %p112 = scmp.ne.s32.totalorder %s98, %s99
      %p113 = scmp.eq.s32.totalorder %s23, 1
      %p114 = por %p112, %p113
      %p116 = scmp.ne.s32.totalorder %s99, %s115
      %p117 = scmp.eq.s32.totalorder %s23, 0
      %p118 = por %p116, %p117
      %p119 = scmp.le.s32.totalorder 1, %s17
      %p120 = scmp.lt.s32.totalorder %s17, 3
      %p121 = pnand %p119, %p120
      %p122 = pneg %p121
      // Predicated region
      $region9: #{tpu_custom_call.1} parent=5 // pred_check
        _
      $region10: #{tpu_custom_call.1} parent=5 // pred_check_branch
        %124 = sbr.rel (%p121) target = $region12
      $region11: #{tpu_custom_call.1} parent=5 // pred_region
        %s125 = ssub.s32 %s17, 1
      $region12: #{tpu_custom_call.1} parent=5 // pred_fallthru
        _
      %p126 = scmp.lt.s32.totalorder %s17, 2
      // Predicated region
      $region13: #{tpu_custom_call.1} parent=5 // pred_check
        %p127 = pneg %p126
      $region14: #{tpu_custom_call.1} parent=5 // pred_check_branch
        %129 = sbr.rel (%p127) target = $region16
      $region15: #{tpu_custom_call.1} parent=5 // pred_region
        // Predicated region
        $region17: #{tpu_custom_call.1} parent=15 // pred_check
          %p130 = pneg %p51
        $region18: #{tpu_custom_call.1} parent=15 // pred_check_branch
          %132 = sbr.rel (%p130) target = $region20
        $region19: #{tpu_custom_call.1} parent=15 // pred_region
          %s133 = sand.u32 %s41, 1
          %s134 = scalar_lea.sflag [#allocation3], %s133
          %s135 = sand.u32 %s41, 1
          %s136 = smul.addr %s135, 8
          %s137 = scalar_lea.vmem [#allocation2], %s136
          %s138 = smul.u32 2, %s25
          %s140 = ssub.s32 128, 128
          %141 = vsyncadd %s134, %s140
          %s142 = smul.addr %s24, 2
          %s143 = sadd.s32 %s138, %s142
          %s144 = smul.addr %s143, 64
          %s145 = scalar_lea.hbm %s0, %s144
          %s147 = sshll.u32 %s137, 4
          %s148 = int_to_ptr.vmem [resolvable:$true] %s147
          %150 = dma.hbm_to_vmem [thread:$0]  %s145, 128, %s148, %s134
        $region20: #{tpu_custom_call.1} parent=15 // pred_fallthru
          _
        // Predicated region
        $region21: #{tpu_custom_call.1} parent=15 // pred_check
          %p151 = pneg %p79
        $region22: #{tpu_custom_call.1} parent=15 // pred_check_branch
          %153 = sbr.rel (%p151) target = $region24
        $region23: #{tpu_custom_call.1} parent=15 // pred_region
          %s154 = sand.u32 %s69, 1
          %s155 = scalar_lea.sflag [#allocation6], %s154
          %s156 = sand.u32 %s69, 1
          %s157 = smul.addr %s156, 2
          %s158 = scalar_lea.vmem [#allocation5], %s157
          %s159 = smul.u32 2, %s25
          %s161 = ssub.s32 32, 32
          %162 = vsyncadd %s155, %s161
          %s163 = smul.addr %s24, 2
          %s164 = sadd.s32 %s159, %s163
          %s165 = smul.addr %s164, 16
          %s166 = scalar_lea.hbm %s1, %s165
          %s168 = sshll.u32 %s158, 4
          %s169 = int_to_ptr.vmem [resolvable:$true] %s168
          %171 = dma.hbm_to_vmem [thread:$0]  %s166, 32, %s169, %s155
        $region24: #{tpu_custom_call.1} parent=15 // pred_fallthru
          _
      $region16: #{tpu_custom_call.1} parent=5 // pred_fallthru
        _
      %p172 = scmp.le.s32.totalorder 1, %s17
      %p173 = scmp.lt.s32.totalorder %s17, 3
      %p174 = pnand %p172, %p173
      %p175 = pneg %p174
      // Predicated region
      $region25: #{tpu_custom_call.1} parent=5 // pred_check
        _
      $region26: #{tpu_custom_call.1} parent=5 // pred_check_branch
        %177 = sbr.rel (%p174) target = $region28
      $region27: #{tpu_custom_call.1} parent=5 // pred_region
        %s178 = ssub.s32 %s17, 1
        %s179 = sand.u32 %s44, 1
        %s180 = scalar_lea.sflag [#allocation3], %s179
        %s181 = sand.u32 %s44, 1
        %s182 = smul.addr %s181, 8
        %s183 = scalar_lea.vmem [#allocation2], %s182
        // Predicated region
        $region29: #{tpu_custom_call.1} parent=27 // pred_check
          %p184 = pneg %p57
        $region30: #{tpu_custom_call.1} parent=27 // pred_check_branch
          %186 = sbr.rel (%p184) target = $region32
        $region31: #{tpu_custom_call.1} parent=27 // pred_region
          %187 = dma.done %s180, 128
        $region32: #{tpu_custom_call.1} parent=27 // pred_fallthru
          _
        %s188 = sand.u32 %s72, 1
        %s189 = scalar_lea.sflag [#allocation6], %s188
        %s190 = sand.u32 %s72, 1
        %s191 = smul.addr %s190, 2
        %s192 = scalar_lea.vmem [#allocation5], %s191
        // Predicated region
        $region33: #{tpu_custom_call.1} parent=27 // pred_check
          %p193 = pneg %p85
        $region34: #{tpu_custom_call.1} parent=27 // pred_check_branch
          %195 = sbr.rel (%p193) target = $region36
        $region35: #{tpu_custom_call.1} parent=27 // pred_region
          %196 = dma.done %s189, 32
        $region36: #{tpu_custom_call.1} parent=27 // pred_fallthru
          _
        %s197 = sand.u32 %s44, 1
        %s198 = scalar_lea.sflag [#allocation3], %s197
        %s199 = sand.u32 %s44, 1
        %s200 = smul.addr %s199, 8
        %s201 = scalar_lea.vmem [#allocation2], %s200
        %p202 = pneg %p57
        %p203 = pneg %p54
        %s204 = sand.u32 %s72, 1
        %s205 = scalar_lea.sflag [#allocation6], %s204
        %s206 = sand.u32 %s72, 1
        %s207 = smul.addr %s206, 2
        %s208 = scalar_lea.vmem [#allocation5], %s207
        %p209 = pneg %p85
        %p210 = pneg %p82
        %p211 = pneg %p111
        %p212 = pneg %p108
        %s213 = sand.u32 %s98, 1
        %s214 = scalar_lea.sflag [#allocation4], %s213
        %s215 = sand.u32 %s98, 1
        %s216 = smul.addr %s215, 2
        %s217 = scalar_lea.vmem [#allocation7], %s216
        %s218 = smul.u32 2, %s27
        %s219 = smul.u32 2, %s27
        %p220 = scmp.eq.s32.totalorder %s27, 0
        // Predicated region
        $region37: #{tpu_custom_call.1} parent=27 // pred_check
          %p221 = pneg %p220
        $region38: #{tpu_custom_call.1} parent=27 // pred_check_branch
          %223 = sbr.rel (%p221) target = $region40
        $region39: #{tpu_custom_call.1} parent=27 // pred_region
          %v224 = vlaneseq
          %vm225 = vcmp.ge.s32.totalorder %v224, 0
          %vm226 = vcmp.lt.s32.totalorder %v224, 256
          %vm227 = vmand %vm225, %vm226
          %228 = vst.msk [vmem:[%s217] sm:$0x3] %vm227, 0.0
        $region40: #{tpu_custom_call.1} parent=27 // pred_fallthru
          _
        %v229 = vld [vmem:[%s183] sm:$0xff]
        %v230 = vld [vmem:[%s192] sm:$0x3]
        %v232 = vcombine.high %v229, %v229
        %vm234 = vcmask 1043456
        %v235 = vsel %vm234, %v229, -inf
        %v236 = vrot.slane %v235, 4
        %v237 = vmax.f32 %v235, %v236
        %v238 = vrot.slane %v237, 2
        %v239 = vmax.f32 %v237, %v238
        %v240 = vrot.slane %v239, 1
        %v241 = vmax.f32 %v239, %v240
        %v242 = vsel %vm234, %v232, -inf
        %v243 = vrot.slane %v242, 4
        %v244 = vmax.f32 %v242, %v243
        %v245 = vrot.slane %v244, 2
        %v246 = vmax.f32 %v244, %v245
        %v247 = vrot.slane %v246, 1
        %v248 = vmax.f32 %v246, %v247
        %v251 = vcombine.low %v241, %v248
        %v253 = vsub.f32 %v229, %v251
        %v254 = vmul.f32 %v253, 1.442695
        %v255 = vpow.pop %v254
        %v257 = vcombine.high %v255, %v255
        %v259 = vsel %vm234, %v255, 0.0
        %v260 = vrot.slane %v259, 4
        %v261 = vadd.f32 %v259, %v260
        %v262 = vrot.slane %v261, 2
        %v263 = vadd.f32 %v261, %v262
        %v264 = vrot.slane %v263, 1
        %v265 = vadd.f32 %v263, %v264
        %v266 = vsel %vm234, %v257, 0.0
        %v267 = vrot.slane %v266, 4
        %v268 = vadd.f32 %v266, %v267
        %v269 = vrot.slane %v268, 2
        %v270 = vadd.f32 %v268, %v269
        %v271 = vrot.slane %v270, 1
        %v272 = vadd.f32 %v270, %v271
        %v273 = vlaneseq
        %v274 = vshrl.u32 %v273, 7
        %v275 = vlaneseq
        %v276 = vshrl.u32 %v275, 7
        %v277 = vsub.s32 0, %v276
        %v278 = vrot.slane %v230, %v277
        %v279 = vlaneseq
        %v280 = vshrl.u32 %v279, 7
        %v281 = vsub.s32 1, %v280
        %v282 = vrot.slane %v230, %v281
        %vm283 = vcmp.eq.s32.totalorder %v274, %v278
        %vm284 = vcmp.eq.s32.totalorder %v274, %v282
        %v285 = vsel %vm283, %v229, 0.0
        %v286 = vsel %vm284, %v232, 0.0
        %v287 = vsel %vm234, %v285, 0.0
        %v288 = vrot.slane %v287, 4
        %v289 = vadd.f32 %v287, %v288
        %v290 = vrot.slane %v289, 2
        %v291 = vadd.f32 %v289, %v290
        %v292 = vrot.slane %v291, 1
        %v293 = vadd.f32 %v291, %v292
        %v294 = vsel %vm234, %v286, 0.0
        %v295 = vrot.slane %v294, 4
        %v296 = vadd.f32 %v294, %v295
        %v297 = vrot.slane %v296, 2
        %v298 = vadd.f32 %v296, %v297
        %v299 = vrot.slane %v298, 1
        %v300 = vadd.f32 %v298, %v299
        %v301 = vlog2.pop %v265
        %v302 = vmul.f32 %v301, 0.6931472
        %v303 = vlog2.pop %v272
        %v304 = vmul.f32 %v303, 0.6931472
        %v305 = vadd.f32 %v302, %v241
        %v306 = vadd.f32 %v304, %v248
        %v307 = vsub.f32 %v305, %v293
        %v308 = vsub.f32 %v306, %v300
        %v309 = vsub.f32 0.0, %v307
        %v310 = vsub.f32 0.0, %v308
        %v311 = vmul.f32 %v309, 1.442695
        %v312 = vpow.pop %v311
        %v313 = vmul.f32 %v310, 1.442695
        %v314 = vpow.pop %v313
        %v315 = vsub.f32 1.0, %v312
        %v316 = vsub.f32 1.0, %v314
        %v317 = vmul.f32 %v315, %v315
        %v318 = vmul.f32 %v316, %v316
        %v319 = vmul.f32 %v317, %v307
        %v320 = vmul.f32 %v318, %v308
        %v321 = vld [vmem:[%s217] sm:$0x3]
        %v324 = vcombine.low %v319, %v320
        %v326 = vunpack.c.l.s4 1966171168
        %v327 = vunpack.c.0.s8 %v326
        %v328 = vlaneseq
        %v329 = vshrl.u32 %v328, 7
        %v330 = vsub.s32 %v327, %v329
        %v331 = vrot.slane %v324, %v330
        %v333 = vunpack.c.l.s4 1966171168
        %v334 = vunpack.c.0.s8 %v333
        %v335 = vlaneseq
        %v336 = vshrl.u32 %v335, 7
        %v337 = vsub.s32 %v334, %v336
        %v338 = vrot.slane %v331, %v337
        %v340 = vadd.f32 %v321, %v338
        %v341 = vlaneseq
        %vm342 = vcmp.ge.s32.totalorder %v341, 0
        %vm343 = vcmp.lt.s32.totalorder %v341, 256
        %vm344 = vmand %vm342, %vm343
        %345 = vst.msk [vmem:[%s217] sm:$0x3] %vm344, %v340
        %s346 = sand.u32 %s98, 1
        %s347 = scalar_lea.sflag [#allocation4], %s346
        %s348 = sand.u32 %s98, 1
        %s349 = smul.addr %s348, 2
        %s350 = scalar_lea.vmem [#allocation7], %s349
        // Predicated region
        $region41: #{tpu_custom_call.1} parent=27 // pred_check
          %p351 = pneg %p108
        $region42: #{tpu_custom_call.1} parent=27 // pred_check_branch
          %353 = sbr.rel (%p351) target = $region44
        $region43: #{tpu_custom_call.1} parent=27 // pred_region
          %s355 = ssub.s32 32, 32
          %356 = vsyncadd %s347, %s355
          %s357 = smul.addr %s26, 2
          %s358 = smul.addr %s357, 16
          %s359 = scalar_lea.hbm %s2, %s358
          %s361 = sshll.u32 %s350, 4
          %s362 = int_to_ptr.vmem [resolvable:$true] %s361
          %364 = dma.vmem_to_hbm [thread:$0]  %s362, 32, %s359, %s347
        $region44: #{tpu_custom_call.1} parent=27 // pred_fallthru
          _
      $region28: #{tpu_custom_call.1} parent=5 // pred_fallthru
        _
      %p365 = scmp.le.s32.totalorder 2, %s17
      // Predicated region
      $region45: #{tpu_custom_call.1} parent=5 // pred_check
        %p366 = pneg %p365
      $region46: #{tpu_custom_call.1} parent=5 // pred_check_branch
        %368 = sbr.rel (%p366) target = $region48
      $region47: #{tpu_custom_call.1} parent=5 // pred_region
        %s369 = ssub.s32 %s17, 2
        // Predicated region
        $region49: #{tpu_custom_call.1} parent=47 // pred_check
          %p370 = pneg %p114
        $region50: #{tpu_custom_call.1} parent=47 // pred_check_branch
          %372 = sbr.rel (%p370) target = $region52
        $region51: #{tpu_custom_call.1} parent=47 // pred_region
          %s373 = sand.u32 %s99, 1
          %s374 = scalar_lea.sflag [#allocation4], %s373
          %s375 = sand.u32 %s99, 1
          %s376 = smul.addr %s375, 2
          %s377 = scalar_lea.vmem [#allocation7], %s376
          %378 = dma.done %s374, 32
        $region52: #{tpu_custom_call.1} parent=47 // pred_fallthru
          _
      $region48: #{tpu_custom_call.1} parent=5 // pred_fallthru
        _
    $region6: #{tpu_custom_call.1} parent=1 // loop_footer
      %s21 = sadd.s32 1, %s17
    $region7: #{tpu_custom_call.1} parent=1 // loop_footer_branch
      %16 = sbr.rel target = $region3
    $region8: #{tpu_custom_call.1} parent=1 // loop_exit
      _
    %379 = vsyncpa [#allocation3], 1
    %s380 = scalar_lea.sflag [#allocation3], 1
    %381 = vsyncpa %s380, 1
    %382 = vsyncpa [#allocation6], 1
    %s383 = scalar_lea.sflag [#allocation6], 1
    %384 = vsyncpa %s383, 1
    %385 = vsyncpa [#allocation4], 1
    %s386 = scalar_lea.sflag [#allocation4], 1
    %387 = vsyncpa %s386, 1

</llo_original>
